<compile_context>
chip_gen: v7x
topology: tpu7x:2x2x1
jax: 0.10.0
libtpu: 0.0.40
codegen_flags: <defaults>
</compile_context>

<pallas_src>
import functools
from typing import NamedTuple

import jax
import jax.numpy as jnp
from jax.experimental import pallas as pl
from jax.experimental.pallas import tpu as pltpu

_MIB = 1024 * 1024
_HAS_BUFFERED = hasattr(pl, "Buffered")  # single-buffer grid-invariant blocks


def _round_up(x, m):
    return (x + m - 1) // m * m


def _vmem_capacity_bytes():
    try:
        return int(pltpu.get_tpu_info().vmem_capacity_bytes)
    except Exception:
        return 128 * _MIB  # v5e/v6e default; v7x reports 64 MiB when queryable


# ----------------------------------------------------------------------------
# Parameter preparation (hoisted out of the forward path).
# ----------------------------------------------------------------------------
class MLPParams(NamedTuple):
    w: jax.Array    # (depth, dim_pad, dim_pad), param dtype, [in, out] layout
    b: jax.Array    # (depth, 1, dim_pad), float32
    dim: int        # original (unpadded) feature dim


def prepare_mlp_params(weights, biases, param_dtype=jnp.float32):
    """weights: (depth, dim_in, dim_out) == PyTorch weight.T; biases: (depth, dim)."""
    depth, dim, dim2 = weights.shape
    assert dim == dim2 and biases.shape == (depth, dim)
    dim_pad = _round_up(dim, 128)  # lane-dense feature dim (unmasked vst, full MXU lanes)
    if dim_pad == dim:
        w = weights.astype(param_dtype)
        b = biases.astype(jnp.float32).reshape(depth, 1, dim)
    else:
        # Zero padding is mathematically inert: padded in-features are zero,
        # padded out-columns/bias are zero, and ReLU(0)=0 into the next layer.
        w = (jnp.zeros((depth, dim_pad, dim_pad), jnp.float32)
             .at[:, :dim, :dim].set(weights.astype(jnp.float32))
             .astype(param_dtype))
        b = (jnp.zeros((depth, 1, dim_pad), jnp.float32)
             .at[:, 0, :dim].set(biases.astype(jnp.float32)))
    return MLPParams(w=w, b=b, dim=dim)


# ----------------------------------------------------------------------------
# Kernels.
# ----------------------------------------------------------------------------
def _mlp_resident_kernel(x_ref, w_ref, b_ref, o_ref, *, depth):
    # x_ref: (tile_m, dim_pad) act dtype (f32 or bf16)
    # w_ref: (depth, dim_pad, dim_pad) param dtype, [in, out] layout (resident)
    # b_ref: (depth, 1, dim_pad) f32 (resident)
    h = x_ref[...]
    for l in range(depth):  # depth is small & static -> unrolled
        h = jnp.dot(h.astype(w_ref.dtype), w_ref[l],
                    preferred_element_type=jnp.float32)
        h = jnp.maximum(h + b_ref[l], 0.0)  # bias + ReLU in f32 (v5e has no bf16 VPU)
    o_ref[...] = h.astype(o_ref.dtype)


def _mlp_stream_kernel(x_ref, w_ref, b_ref, o_ref, h_ref, *, depth):
    # Layer-streaming path: grid = (row tiles, depth). Only one layer's weights
    # are live in VMEM at a time; h is carried across layer steps in scratch.
    l = pl.program_id(1)

    @pl.when(l == 0)
    def _():
        h_ref[...] = x_ref[...].astype(jnp.float32)

    h = jnp.dot(h_ref[...].astype(w_ref.dtype), w_ref[0],
                preferred_element_type=jnp.float32)
    h = jnp.maximum(h + b_ref[0], 0.0)
    h_ref[...] = h

    @pl.when(l == depth - 1)
    def _():
        o_ref[...] = h.astype(o_ref.dtype)


# ----------------------------------------------------------------------------
# pallas_call builders.
# ----------------------------------------------------------------------------
def _resident_call(x2d, w, b, *, tile_m, vmem_limit):
    m_pad, dim_pad = x2d.shape
    depth = w.shape[0]
    pbytes = jnp.dtype(w.dtype).itemsize
    abytes = jnp.dtype(x2d.dtype).itemsize

    # Grid-invariant weights/biases: single-buffer them (halves their VMEM).
    wb_pipe = dict(pipeline_mode=pl.Buffered(1)) if _HAS_BUFFERED else {}

    cost = pl.CostEstimate(
        flops=2 * m_pad * dim_pad * dim_pad * depth,
        transcendentals=0,
        bytes_accessed=(2 * m_pad * dim_pad * abytes
                        + depth * dim_pad * dim_pad * pbytes
                        + depth * dim_pad * 4),
    )
    return pl.pallas_call(
        functools.partial(_mlp_resident_kernel, depth=depth),
        out_shape=jax.ShapeDtypeStruct((m_pad, dim_pad), x2d.dtype),
        grid_spec=pltpu.PrefetchScalarGridSpec(
            num_scalar_prefetch=0,
            grid=(m_pad // tile_m,),
            in_specs=[
                pl.BlockSpec((tile_m, dim_pad), lambda i: (i, 0)),
                pl.BlockSpec((depth, dim_pad, dim_pad), lambda i: (0, 0, 0), **wb_pipe),
                pl.BlockSpec((depth, 1, dim_pad), lambda i: (0, 0, 0), **wb_pipe),
            ],
            out_specs=pl.BlockSpec((tile_m, dim_pad), lambda i: (i, 0)),
        ),
        compiler_params=pltpu.CompilerParams(
            dimension_semantics=("parallel",),
            vmem_limit_bytes=vmem_limit,
        ),
        cost_estimate=cost,
    )(x2d, w, b)


def _stream_call(x2d, w, b, *, tile_m, vmem_limit):
    m_pad, dim_pad = x2d.shape
    depth = w.shape[0]
    pbytes = jnp.dtype(w.dtype).itemsize
    abytes = jnp.dtype(x2d.dtype).itemsize
    m_tiles = m_pad // tile_m

    cost = pl.CostEstimate(
        flops=2 * m_pad * dim_pad * dim_pad * depth,
        transcendentals=0,
        bytes_accessed=(2 * m_pad * dim_pad * abytes
                        + m_tiles * depth * dim_pad * dim_pad * pbytes
                        + depth * dim_pad * 4),
    )
    return pl.pallas_call(
        functools.partial(_mlp_stream_kernel, depth=depth),
        out_shape=jax.ShapeDtypeStruct((m_pad, dim_pad), x2d.dtype),
        grid_spec=pltpu.PrefetchScalarGridSpec(
            num_scalar_prefetch=0,
            grid=(m_tiles, depth),
            in_specs=[
                pl.BlockSpec((tile_m, dim_pad), lambda i, l: (i, 0)),
                # per-layer weight block, default double-buffered -> next-layer
                # weight DMA overlaps current layer's MXU work.
                pl.BlockSpec((1, dim_pad, dim_pad), lambda i, l: (l, 0, 0)),
                pl.BlockSpec((1, 1, dim_pad), lambda i, l: (l, 0, 0)),
            ],
            out_specs=pl.BlockSpec((tile_m, dim_pad), lambda i, l: (i, 0)),
            scratch_shapes=[pltpu.VMEM((tile_m, dim_pad), jnp.float32)],
        ),
        compiler_params=pltpu.CompilerParams(
            dimension_semantics=("parallel", "arbitrary"),
            vmem_limit_bytes=vmem_limit,
        ),
        cost_estimate=cost,
    )(x2d, w, b)


# ----------------------------------------------------------------------------
# Tile selection & forward wrapper.
# ----------------------------------------------------------------------------
def _choose_tile_m(m_rows, dim_pad, act_bytes, w_resident_bytes, capacity,
                   *, two_cores, requested=None):
    row_align = 8 if act_bytes >= 4 else 16  # sublane packing for bf16
    max_rows = _round_up(m_rows, row_align)
    if requested is not None:
        tm = max(row_align, (int(requested) // row_align) * row_align)
        return min(tm, max_rows)

    # Size the row tile from leftover VMEM: with weights resident the only
    # per-step buffers are the double-buffered x/out tiles (+ f32 h scratch).
    headroom = 8 * _MIB
    leftover = max(capacity - w_resident_bytes - headroom, 4 * _MIB)
    per_row = (4 * act_bytes + 4) * dim_pad
    tm = min(1024, leftover // per_row)
    if tm >= 256:
        tm = (tm // 256) * 256            # MXU-friendly multiple of 256
    else:
        tm = max(row_align, (tm // row_align) * row_align)
    tm = min(tm, max_rows)
    if two_cores and m_rows >= 512:
        # v7x-like megacore: keep >= 2 parallel grid steps, never below 256.
        tm = min(tm, max(256, _round_up((m_rows + 1) // 2, row_align)))
    return max(row_align, tm)


def mlp_forward(x, params: MLPParams, *, tile_m=None, force_stream=False):
    """x: (..., dim); params from prepare_mlp_params. Returns (..., dim).

    Output dtype follows the activation dtype (f32 for f32 params, bf16 for
    bf16 params — activations stay bf16 end-to-end in HBM on that path)."""
    w, b, dim = params.w, params.b, params.dim
    depth, dim_pad, _ = w.shape
    assert x.shape[-1] == dim

    act_dtype = jnp.bfloat16 if w.dtype == jnp.bfloat16 else jnp.float32
    lead = x.shape[:-1]
    x2d = x.reshape(-1, dim).astype(act_dtype)
    m_rows = x2d.shape[0]

    capacity = _vmem_capacity_bytes()
    small_vmem = capacity <= 64 * _MIB          # v7x-like (64 MiB VMEM, 2 TCs)
    pbytes = jnp.dtype(w.dtype).itemsize
    abytes = jnp.dtype(act_dtype).itemsize
    weight_bytes = depth * dim_pad * dim_pad * pbytes

    # Generation-aware resident-weight ceiling (single-buffered weights).
    resident_ceiling = 40 * _MIB if small_vmem else 100 * _MIB
    if not _HAS_BUFFERED:
        resident_ceiling //= 2                  # weights would be double-buffered
    stream = force_stream or weight_bytes > resident_ceiling

    if stream:
        w_resident = 2 * dim_pad * dim_pad * pbytes          # one layer, double-buffered
    else:
        w_resident = (1 if _HAS_BUFFERED else 2) * weight_bytes

    tm = _choose_tile_m(m_rows, dim_pad, abytes, w_resident, capacity,
                        two_cores=small_vmem, requested=tile_m)
    m_pad = _round_up(max(m_rows, tm), tm)

    act_tiles = 2 * 2 * tm * dim_pad * abytes                # x + out, double-buffered
    h_scratch = tm * dim_pad * 4 if stream else 0
    bias_bytes = depth * dim_pad * 4 * (1 if _HAS_BUFFERED else 2)
    vmem_est = w_resident + bias_bytes + act_tiles + h_scratch
    vmem_cap = capacity - (6 * _MIB if small_vmem else 24 * _MIB)
    vmem_limit = int(min(max(int(1.5 * vmem_est), 32 * _MIB), vmem_cap))

    # Skip the activation padding copy when shapes are already aligned.
    if m_pad == m_rows and dim_pad == dim:
        x2d_p = x2d
    else:
        x2d_p = jnp.zeros((m_pad, dim_pad), act_dtype).at[:m_rows, :dim].set(x2d)

    if stream:
        y_p = _stream_call(x2d_p, w, b, tile_m=tm, vmem_limit=vmem_limit)
    else:
        y_p = _resident_call(x2d_p, w, b, tile_m=tm, vmem_limit=vmem_limit)

    if m_pad != m_rows or dim_pad != dim:
        y_p = y_p[:m_rows, :dim]
    return y_p.reshape(*lead, dim)


def mlp_forward_raw(x, weights, biases, *, param_dtype=jnp.float32, **kw):
    """Convenience one-shot path; prefer prepare_mlp_params + mlp_forward."""
    return mlp_forward(x, prepare_mlp_params(weights, biases, param_dtype), **kw)


# ----------------------------------------------------------------------------
# Reference & init helpers.
# ----------------------------------------------------------------------------
def init_mlp_params(key, dim, depth):
    """Deterministic init mimicking nn.Linear default (uniform(-1/sqrt(dim), 1/sqrt(dim)))."""
    bound = 1.0 / jnp.sqrt(jnp.asarray(dim, jnp.float32))
    kw, kb = jax.random.split(key)
    # stored as (depth, dim_in, dim_out) == PyTorch weight (out, in) transposed
    weights = jax.random.uniform(kw, (depth, dim, dim), jnp.float32, -bound, bound)
    biases = jax.random.uniform(kb, (depth, dim), jnp.float32, -bound, bound)
    return weights, biases


def mlp_reference(x, weights, biases):
    h = x.astype(jnp.float32)
    for l in range(weights.shape[0]):
        h = jnp.maximum(
            jnp.dot(h, weights[l], precision=jax.lax.Precision.HIGHEST) + biases[l], 0.0)
    return h


if __name__ == "__main__":
    dim, depth = 32, 3
    key = jax.random.PRNGKey(0)
    k_x, k_p = jax.random.split(key)

    # small input: batch=2, seq=8, feature=dim -> (2, 8, 32)
    x = jax.random.normal(k_x, (2, 8, dim), jnp.float32)
    weights, biases = init_mlp_params(k_p, dim, depth)
    y_ref = mlp_reference(x, weights, biases)

    # f32 path (params prepared once; padding/cast hoisted out of the call).
    params_f32 = prepare_mlp_params(weights, biases, jnp.float32)
    y = jax.block_until_ready(mlp_forward(x, params_f32))
    assert y.shape == x.shape
    assert jnp.allclose(y, y_ref, atol=1e-5, rtol=1e-5), "f32 resident mismatch"

    # Layer-streaming path (auto-selected for large dims on small-VMEM chips;
    # forced here at small shapes to validate correctness).
    y_stream = jax.block_until_ready(mlp_forward(x, params_f32, force_stream=True))
    assert jnp.allclose(y_stream, y_ref, atol=1e-5, rtol=1e-5), "f32 stream mismatch"

    # bf16 params + bf16 activations end-to-end in HBM, f32 MXU accumulation.
    params_bf16 = prepare_mlp_params(weights, biases, jnp.bfloat16)
    y_bf16 = jax.block_until_ready(mlp_forward(x, params_bf16))
    assert y_bf16.shape == x.shape
    assert jnp.allclose(y_bf16.astype(jnp.float32), y_ref, atol=7.5e-2, rtol=7.5e-2), \
        "bf16 mismatch vs JAX reference"

    print("KERNEL_OK")
</pallas_src>

<mosaic_0001>
module attributes {stable_mosaic.version = 11 : i64} {
  func.func @_mlp_resident_kernel(%arg0: i32, %arg1: memref<16x128xf32, #tpu.memory_space<vmem>>, %arg2: memref<3x128x128xf32, #tpu.memory_space<vmem>>, %arg3: memref<3x1x128xf32, #tpu.memory_space<vmem>>, %arg4: memref<16x128xf32, #tpu.memory_space<vmem>>) attributes {dimension_semantics = [#tpu.dimension_semantics<parallel>], iteration_bounds = array<i64: 1>, scalar_prefetch = 0 : i64, scratch_operands = 0 : i64, tpu.core_type = #tpu.core_type<tc>, window_params = [{transform_indices = @transform_0, window_bounds = array<i64: 16, 128>}, {pipeline_mode = #tpu.pipeline_mode<synchronous>, transform_indices = @transform_1, window_bounds = array<i64: 3, 128, 128>}, {pipeline_mode = #tpu.pipeline_mode<synchronous>, transform_indices = @transform_2, window_bounds = array<i64: 3, 1, 128>}, {transform_indices = @transform_3, window_bounds = array<i64: 16, 128>}]} {
    %c0 = arith.constant 0 : index
    %c0_0 = arith.constant 0 : index
    %0 = vector.load %arg1[%c0, %c0_0] : memref<16x128xf32, #tpu.memory_space<vmem>>, vector<16x128xf32>
    %c0_1 = arith.constant 0 : index
    %c0_2 = arith.constant 0 : index
    %c0_3 = arith.constant 0 : index
    %1 = vector.load %arg2[%c0_1, %c0_2, %c0_3] : memref<3x128x128xf32, #tpu.memory_space<vmem>>, vector<1x128x128xf32>
    %2 = vector.shape_cast %1 : vector<1x128x128xf32> to vector<128x128xf32>
    %cst = arith.constant dense<0.000000e+00> : vector<16x128xf32>
    %3 = tpu.matmul %0, %2, %cst {dimension_numbers = #tpu.dot_dimension_numbers<[1], [0], [0], [1], [0, 0, 1, 1], [], []>} : vector<16x128xf32>, vector<128x128xf32>, vector<16x128xf32> -> vector<16x128xf32>
    %c0_4 = arith.constant 0 : index
    %c0_5 = arith.constant 0 : index
    %c0_6 = arith.constant 0 : index
    %4 = vector.load %arg3[%c0_4, %c0_5, %c0_6] : memref<3x1x128xf32, #tpu.memory_space<vmem>>, vector<1x1x128xf32>
    %5 = vector.shape_cast %4 : vector<1x1x128xf32> to vector<1x128xf32>
    %6 = vector.broadcast %5 : vector<1x128xf32> to vector<16x128xf32>
    %7 = arith.addf %3, %6 : vector<16x128xf32>
    %cst_7 = arith.constant 0.000000e+00 : f32
    %8 = vector.broadcast %cst_7 : f32 to vector<16x128xf32>
    %9 = arith.maximumf %7, %8 : vector<16x128xf32>
    %c1 = arith.constant 1 : index
    %c0_8 = arith.constant 0 : index
    %c0_9 = arith.constant 0 : index
    %10 = vector.load %arg2[%c1, %c0_8, %c0_9] : memref<3x128x128xf32, #tpu.memory_space<vmem>>, vector<1x128x128xf32>
    %11 = vector.shape_cast %10 : vector<1x128x128xf32> to vector<128x128xf32>
    %cst_10 = arith.constant dense<0.000000e+00> : vector<16x128xf32>
    %12 = tpu.matmul %9, %11, %cst_10 {dimension_numbers = #tpu.dot_dimension_numbers<[1], [0], [0], [1], [0, 0, 1, 1], [], []>} : vector<16x128xf32>, vector<128x128xf32>, vector<16x128xf32> -> vector<16x128xf32>
    %c1_11 = arith.constant 1 : index
    %c0_12 = arith.constant 0 : index
    %c0_13 = arith.constant 0 : index
    %13 = vector.load %arg3[%c1_11, %c0_12, %c0_13] : memref<3x1x128xf32, #tpu.memory_space<vmem>>, vector<1x1x128xf32>
    %14 = vector.shape_cast %13 : vector<1x1x128xf32> to vector<1x128xf32>
    %15 = vector.broadcast %14 : vector<1x128xf32> to vector<16x128xf32>
    %16 = arith.addf %12, %15 : vector<16x128xf32>
    %cst_14 = arith.constant 0.000000e+00 : f32
    %17 = vector.broadcast %cst_14 : f32 to vector<16x128xf32>
    %18 = arith.maximumf %16, %17 : vector<16x128xf32>
    %c2 = arith.constant 2 : index
    %c0_15 = arith.constant 0 : index
    %c0_16 = arith.constant 0 : index
    %19 = vector.load %arg2[%c2, %c0_15, %c0_16] : memref<3x128x128xf32, #tpu.memory_space<vmem>>, vector<1x128x128xf32>
    %20 = vector.shape_cast %19 : vector<1x128x128xf32> to vector<128x128xf32>
    %cst_17 = arith.constant dense<0.000000e+00> : vector<16x128xf32>
    %21 = tpu.matmul %18, %20, %cst_17 {dimension_numbers = #tpu.dot_dimension_numbers<[1], [0], [0], [1], [0, 0, 1, 1], [], []>} : vector<16x128xf32>, vector<128x128xf32>, vector<16x128xf32> -> vector<16x128xf32>
    %c2_18 = arith.constant 2 : index
    %c0_19 = arith.constant 0 : index
    %c0_20 = arith.constant 0 : index
    %22 = vector.load %arg3[%c2_18, %c0_19, %c0_20] : memref<3x1x128xf32, #tpu.memory_space<vmem>>, vector<1x1x128xf32>
    %23 = vector.shape_cast %22 : vector<1x1x128xf32> to vector<1x128xf32>
    %24 = vector.broadcast %23 : vector<1x128xf32> to vector<16x128xf32>
    %25 = arith.addf %21, %24 : vector<16x128xf32>
    %cst_21 = arith.constant 0.000000e+00 : f32
    %26 = vector.broadcast %cst_21 : f32 to vector<16x128xf32>
    %27 = arith.maximumf %25, %26 : vector<16x128xf32>
    %c0_22 = arith.constant 0 : index
    %c0_23 = arith.constant 0 : index
    %28 = vector.load %arg4[%c0_22, %c0_23] : memref<16x128xf32, #tpu.memory_space<vmem>>, vector<16x128xf32>
    tpu.vector_store %arg4[%c0_22, %c0_23], %27 {strides = array<i32>} : memref<16x128xf32, #tpu.memory_space<vmem>>, vector<16x128xf32>,
    return
  }
  func.func @transform_0(%arg0: i32) -> (i32, i32) {
    %c0_i32 = arith.constant 0 : i32
    %c0_i32_0 = arith.constant 0 : i32
    return %arg0, %c0_i32 : i32, i32
  }
  func.func @transform_1(%arg0: i32) -> (i32, i32, i32) {
    %c0_i32 = arith.constant 0 : i32
    %c0_i32_0 = arith.constant 0 : i32
    %c0_i32_1 = arith.constant 0 : i32
    %c0_i32_2 = arith.constant 0 : i32
    return %c0_i32, %c0_i32_0, %c0_i32_1 : i32, i32, i32
  }
  func.func @transform_2(%arg0: i32) -> (i32, i32, i32) {
    %c0_i32 = arith.constant 0 : i32
    %c0_i32_0 = arith.constant 0 : i32
    %c0_i32_1 = arith.constant 0 : i32
    %c0_i32_2 = arith.constant 0 : i32
    return %c0_i32, %c0_i32_0, %c0_i32_1 : i32, i32, i32
  }
  func.func @transform_3(%arg0: i32) -> (i32, i32) {
    %c0_i32 = arith.constant 0 : i32
    %c0_i32_0 = arith.constant 0 : i32
    return %arg0, %c0_i32 : i32, i32
  }
}

</mosaic_0001>

<llo_original>
// kernel: tpu_custom_call.1
$region0: #{tpu_custom_call.1}
  #allocation0 [shape = 'u32[]', space=smem, size = 0x4, offset = 0x4, fixed_abs, tag = 'smem constant byte address 0x4 - core index']
  #allocation1 [shape = 'u32[144,128]{1,0:T(1,128)}', space=vmem, size = 0x12000, scoped, tag = 'internal scratch']
  %s0 = inlined_call_operand.hbm [shape: f32[16,128], index: 0, kind: input, shape index: {}]
  %s1 = inlined_call_operand.hbm [shape: f32[3,128,128], index: 1, kind: input, shape index: {}]
  %s2 = inlined_call_operand.vmem [shape: f32[3,1,128], index: 2, kind: input, shape index: {}]
  %s3 = inlined_call_operand.hbm [shape: f32[16,128], index: 3, kind: output, shape index: {}]
  %s4 = sld [smem:[#allocation0]]
  $region30: #{tpu_custom_call.1} parent=0
    _
  %s6 = ssub.s32 1, %s4
  %s7 = scalar_select 0, %s6, %s4
  $region1: #{tpu_custom_call.1} parent=0
    #allocation2 [shape = 'u8[8192]{0}', space=vmem, size = 0x2000, scoped, tag = 'input window, operand 0, single buffered']
    #allocation3 [shape = 's32[1]{0}', space=sflag, size = 0x4, scoped, tag = 'scoped memory for tpu_custom_call.1']
    #allocation4 [shape = 's32[1]{0}', space=sflag, size = 0x4, scoped, tag = 'scoped memory for tpu_custom_call.1']
    #allocation5 [shape = 'u8[196608]{0}', space=vmem, size = 0x30000, scoped, tag = 'input window, operand 1, single buffered']
    #allocation6 [shape = 's32[1]{0}', space=sflag, size = 0x4, scoped, tag = 'scoped memory for tpu_custom_call.1']
    #allocation7 [shape = 'u8[8192]{0}', space=vmem, size = 0x2000, scoped, tag = 'output window, operand 0, single buffered']
    %8 = vsyncpa [#allocation3], 0
    %9 = vsyncpa [#allocation6], 0
    %10 = vsyncpa [#allocation4], 0
    // Predicated region
    $region2: #{tpu_custom_call.1} parent=1 // pred_check
      _
    $region3: #{tpu_custom_call.1} parent=1 // pred_check_branch
      %12 = sbr.rel (0) target = $region5
    $region4: #{tpu_custom_call.1} parent=1 // pred_region
      %s14 = ssub.s32 256, 256
      %15 = vsyncadd [#allocation3], %s14
      %s16 = sshll.u32 [#allocation2], 4
      %s17 = int_to_ptr.vmem [resolvable:$true] %s16
      %22 = dma.hbm_to_vmem [thread:$0]  %s0, 256, %s17, [#allocation3], 128, 128, 8
    $region5: #{tpu_custom_call.1} parent=1 // pred_fallthru
      _
    // Predicated region
    $region6: #{tpu_custom_call.1} parent=1 // pred_check
      _
    $region7: #{tpu_custom_call.1} parent=1 // pred_check_branch
      %24 = sbr.rel (0) target = $region9
    $region8: #{tpu_custom_call.1} parent=1 // pred_region
      %s26 = ssub.s32 6144, 6144
      %27 = vsyncadd [#allocation6], %s26
      %s28 = sshll.u32 [#allocation5], 4
      %s29 = int_to_ptr.vmem [resolvable:$true] %s28
      %34 = dma.hbm_to_vmem [thread:$0]  %s1, 6144, %s29, [#allocation6], 128, 128, 8
    $region9: #{tpu_custom_call.1} parent=1 // pred_fallthru
      _
    // Predicated region
    $region10: #{tpu_custom_call.1} parent=1 // pred_check
      _
    $region11: #{tpu_custom_call.1} parent=1 // pred_check_branch
      %36 = sbr.rel (0) target = $region13
    $region12: #{tpu_custom_call.1} parent=1 // pred_region
      _
    $region13: #{tpu_custom_call.1} parent=1 // pred_fallthru
      _
    // Predicated region
    $region14: #{tpu_custom_call.1} parent=1 // pred_check
      _
    $region15: #{tpu_custom_call.1} parent=1 // pred_check_branch
      %38 = sbr.rel (0) target = $region17
    $region16: #{tpu_custom_call.1} parent=1 // pred_region
      %39 = dma.done [#allocation3], 256
    $region17: #{tpu_custom_call.1} parent=1 // pred_fallthru
      _
    // Predicated region
    $region18: #{tpu_custom_call.1} parent=1 // pred_check
      _
    $region19: #{tpu_custom_call.1} parent=1 // pred_check_branch
      %41 = sbr.rel (0) target = $region21
    $region20: #{tpu_custom_call.1} parent=1 // pred_region
      %42 = dma.done [#allocation6], 6144
    $region21: #{tpu_custom_call.1} parent=1 // pred_fallthru
      _
    %v43 = vld [vmem:[#allocation2] sm:$0xff]
    %v44 = vld [vmem:[#allocation2 + $0x8] sm:$0xff]
    %v45 = vld [vmem:[#allocation5] sm:$0xff]
    %v46 = vld [vmem:[#allocation5 + $0x8] sm:$0xff]
    %v47 = vld [vmem:[#allocation5 + $0x10] sm:$0xff]
    %v48 = vld [vmem:[#allocation5 + $0x18] sm:$0xff]
    %v49 = vld [vmem:[#allocation5 + $0x20] sm:$0xff]
    %v50 = vld [vmem:[#allocation5 + $0x28] sm:$0xff]
    %v51 = vld [vmem:[#allocation5 + $0x30] sm:$0xff]
    %v52 = vld [vmem:[#allocation5 + $0x38] sm:$0xff]
    %v53 = vld [vmem:[#allocation5 + $0x40] sm:$0xff]
    %v54 = vld [vmem:[#allocation5 + $0x48] sm:$0xff]
    %v55 = vld [vmem:[#allocation5 + $0x50] sm:$0xff]
    %v56 = vld [vmem:[#allocation5 + $0x58] sm:$0xff]
    %v57 = vld [vmem:[#allocation5 + $0x60] sm:$0xff]
    %v58 = vld [vmem:[#allocation5 + $0x68] sm:$0xff]
    %v59 = vld [vmem:[#allocation5 + $0x70] sm:$0xff]
    %v60 = vld [vmem:[#allocation5 + $0x78] sm:$0xff]
    %v61 = vld [vmem:[%s2] sm:$0x1]
    %v63 = vlaneseq
    %v64 = vshrl.u32 %v63, 7
    %v65 = vsub.s32 0, %v64
    %v66 = vrot.slane %v61, %v65
    %68 = vmatprep.subr.mxu0 0.0
    %69 = vmatpush1.msra.mxu0 %v45
    %70 = vmatprep.subr.mxu0 0.0
    %71 = vmatpush1.msra.mxu0 %v46
    %72 = vmatprep.subr.mxu0 0.0
    %73 = vmatpush1.msra.mxu0 %v47
    %74 = vmatprep.subr.mxu0 0.0
    %75 = vmatpush1.msra.mxu0 %v48
    %76 = vmatprep.subr.mxu0 0.0
    %77 = vmatpush1.msra.mxu0 %v49
    %78 = vmatprep.subr.mxu0 0.0
    %79 = vmatpush1.msra.mxu0 %v50
    %80 = vmatprep.subr.mxu0 0.0
    %81 = vmatpush1.msra.mxu0 %v51
    %82 = vmatprep.subr.mxu0 0.0
    %83 = vmatpush1.msra.mxu0 %v52
    %84 = vmatprep.subr.mxu0 0.0
    %85 = vmatpush1.msra.mxu0 %v53
    %86 = vmatprep.subr.mxu0 0.0
    %87 = vmatpush1.msra.mxu0 %v54
    %88 = vmatprep.subr.mxu0 0.0
    %89 = vmatpush1.msra.mxu0 %v55
    %90 = vmatprep.subr.mxu0 0.0
    %91 = vmatpush1.msra.mxu0 %v56
    %92 = vmatprep.subr.mxu0 0.0
    %93 = vmatpush1.msra.mxu0 %v57
    %94 = vmatprep.subr.mxu0 0.0
    %95 = vmatpush1.msra.mxu0 %v58
    %96 = vmatprep.subr.mxu0 0.0
    %97 = vmatpush1.msra.mxu0 %v59
    %98 = vmatprep.subr.mxu0 0.0
    %99 = vmatpush1.msra.mxu0 %v60
    %100 = vmatprep.subr.mxu0 0.0
    %101 = vmatpush1.msra.mxu0 0.0
    %102 = vmatprep.subr.mxu0 0.0
    %103 = vmatpush1.msra.mxu0 0.0
    %104 = vmatprep.subr.mxu0 0.0
    %105 = vmatpush1.msra.mxu0 0.0
    %106 = vmatprep.subr.mxu0 0.0
    %107 = vmatpush1.msra.mxu0 0.0
    %108 = vmatprep.subr.mxu0 0.0
    %109 = vmatpush1.msra.mxu0 0.0
    %110 = vmatprep.subr.mxu0 0.0
    %111 = vmatpush1.msra.mxu0 0.0
    %112 = vmatprep.subr.mxu0 0.0
    %113 = vmatpush1.msra.mxu0 0.0
    %114 = vmatprep.subr.mxu0 0.0
    %115 = vmatpush1.msra.mxu0 0.0
    %116 = vmatprep.subr.mxu0 0.0
    %117 = vmatpush1.msra.mxu0 0.0
    %118 = vmatprep.subr.mxu0 0.0
    %119 = vmatpush1.msra.mxu0 0.0
    %120 = vmatprep.subr.mxu0 0.0
    %121 = vmatpush1.msra.mxu0 0.0
    %122 = vmatprep.subr.mxu0 0.0
    %123 = vmatpush1.msra.mxu0 0.0
    %124 = vmatprep.subr.mxu0 0.0
    %125 = vmatpush1.msra.mxu0 0.0
    %126 = vmatprep.subr.mxu0 0.0
    %127 = vmatpush1.msra.mxu0 0.0
    %128 = vmatprep.subr.mxu0 0.0
    %129 = vmatpush1.msra.mxu0 0.0
    %130 = vmatprep.subr.mxu0 0.0
    %131 = vmatpush1.msra.mxu0 0.0
    %132 = vmatprep.mubr.f32.mxu0 0.0
    %133 = vmatmul.mubr.f32.gmra.mrb[0].mxu0 %v43
    %v134 = vpop.f32.mrb[0].mxu0
    %v135 = vadd.f32 %v66, %v134
    %v136 = vpop.f32.mrb[0].mxu0
    %137 = vmatprep.mubr.f32.mxu0 0.0
    %138 = vmatmul.mubr.f32.gmra.mrb[0].mxu0 %v44
    %v139 = vpop.f32.mrb[0].mxu0
    %v140 = vadd.f32 %v66, %v139
    %v141 = vpop.f32.mrb[0].mxu0
    %142 = vdwg.mxu0
    %v143 = vmax.f32 %v135, 0.0
    %v144 = vmax.f32 %v140, 0.0
    %s145 = scalar_lea.vmem [#allocation5], 128
    %v146 = vld [vmem:[%s145] sm:$0xff]
    %v147 = vld [vmem:[%s145 + $0x8] sm:$0xff]
    %v148 = vld [vmem:[%s145 + $0x10] sm:$0xff]
    %v149 = vld [vmem:[%s145 + $0x18] sm:$0xff]
    %v150 = vld [vmem:[%s145 + $0x20] sm:$0xff]
    %v151 = vld [vmem:[%s145 + $0x28] sm:$0xff]
    %v152 = vld [vmem:[%s145 + $0x30] sm:$0xff]
    %v153 = vld [vmem:[%s145 + $0x38] sm:$0xff]
    %v154 = vld [vmem:[%s145 + $0x40] sm:$0xff]
    %v155 = vld [vmem:[%s145 + $0x48] sm:$0xff]
    %v156 = vld [vmem:[%s145 + $0x50] sm:$0xff]
    %v157 = vld [vmem:[%s145 + $0x58] sm:$0xff]
    %v158 = vld [vmem:[%s145 + $0x60] sm:$0xff]
    %v159 = vld [vmem:[%s145 + $0x68] sm:$0xff]
    %v160 = vld [vmem:[%s145 + $0x70] sm:$0xff]
    %v161 = vld [vmem:[%s145 + $0x78] sm:$0xff]
    %s162 = scalar_lea.vmem %s2, 1
    %v163 = vld [vmem:[%s162] sm:$0x1]
    %v165 = vlaneseq
    %v166 = vshrl.u32 %v165, 7
    %v167 = vsub.s32 0, %v166
    %v168 = vrot.slane %v163, %v167
    %170 = vmatprep.subr.mxu0 0.0
    %171 = vmatpush1.msra.mxu0 %v146
    %172 = vmatprep.subr.mxu0 0.0
    %173 = vmatpush1.msra.mxu0 %v147
    %174 = vmatprep.subr.mxu0 0.0
    %175 = vmatpush1.msra.mxu0 %v148
    %176 = vmatprep.subr.mxu0 0.0
    %177 = vmatpush1.msra.mxu0 %v149
    %178 = vmatprep.subr.mxu0 0.0
    %179 = vmatpush1.msra.mxu0 %v150
    %180 = vmatprep.subr.mxu0 0.0
    %181 = vmatpush1.msra.mxu0 %v151
    %182 = vmatprep.subr.mxu0 0.0
    %183 = vmatpush1.msra.mxu0 %v152
    %184 = vmatprep.subr.mxu0 0.0
    %185 = vmatpush1.msra.mxu0 %v153
    %186 = vmatprep.subr.mxu0 0.0
    %187 = vmatpush1.msra.mxu0 %v154
    %188 = vmatprep.subr.mxu0 0.0
    %189 = vmatpush1.msra.mxu0 %v155
    %190 = vmatprep.subr.mxu0 0.0
    %191 = vmatpush1.msra.mxu0 %v156
    %192 = vmatprep.subr.mxu0 0.0
    %193 = vmatpush1.msra.mxu0 %v157
    %194 = vmatprep.subr.mxu0 0.0
    %195 = vmatpush1.msra.mxu0 %v158
    %196 = vmatprep.subr.mxu0 0.0
    %197 = vmatpush1.msra.mxu0 %v159
    %198 = vmatprep.subr.mxu0 0.0
    %199 = vmatpush1.msra.mxu0 %v160
    %200 = vmatprep.subr.mxu0 0.0
    %201 = vmatpush1.msra.mxu0 %v161
    %202 = vmatprep.subr.mxu0 0.0
    %203 = vmatpush1.msra.mxu0 0.0
    %204 = vmatprep.subr.mxu0 0.0
    %205 = vmatpush1.msra.mxu0 0.0
    %206 = vmatprep.subr.mxu0 0.0
    %207 = vmatpush1.msra.mxu0 0.0
    %208 = vmatprep.subr.mxu0 0.0
    %209 = vmatpush1.msra.mxu0 0.0
    %210 = vmatprep.subr.mxu0 0.0
    %211 = vmatpush1.msra.mxu0 0.0
    %212 = vmatprep.subr.mxu0 0.0
    %213 = vmatpush1.msra.mxu0 0.0
    %214 = vmatprep.subr.mxu0 0.0
    %215 = vmatpush1.msra.mxu0 0.0
    %216 = vmatprep.subr.mxu0 0.0
    %217 = vmatpush1.msra.mxu0 0.0
    %218 = vmatprep.subr.mxu0 0.0
    %219 = vmatpush1.msra.mxu0 0.0
    %220 = vmatprep.subr.mxu0 0.0
    %221 = vmatpush1.msra.mxu0 0.0
    %222 = vmatprep.subr.mxu0 0.0
    %223 = vmatpush1.msra.mxu0 0.0
    %224 = vmatprep.subr.mxu0 0.0
    %225 = vmatpush1.msra.mxu0 0.0
    %226 = vmatprep.subr.mxu0 0.0
    %227 = vmatpush1.msra.mxu0 0.0
    %228 = vmatprep.subr.mxu0 0.0
    %229 = vmatpush1.msra.mxu0 0.0
    %230 = vmatprep.subr.mxu0 0.0
    %231 = vmatpush1.msra.mxu0 0.0
    %232 = vmatprep.subr.mxu0 0.0
    %233 = vmatpush1.msra.mxu0 0.0
    %234 = vmatprep.mubr.f32.mxu0 0.0
    %235 = vmatmul.mubr.f32.gmra.mrb[0].mxu0 %v143
    %v236 = vpop.f32.mrb[0].mxu0
    %v237 = vadd.f32 %v168, %v236
    %v238 = vpop.f32.mrb[0].mxu0
    %239 = vmatprep.mubr.f32.mxu0 0.0
    %240 = vmatmul.mubr.f32.gmra.mrb[0].mxu0 %v144
    %v241 = vpop.f32.mrb[0].mxu0
    %v242 = vadd.f32 %v168, %v241
    %v243 = vpop.f32.mrb[0].mxu0
    %244 = vdwg.mxu0
    %v245 = vmax.f32 %v237, 0.0
    %v246 = vmax.f32 %v242, 0.0
    %s247 = scalar_lea.vmem [#allocation5], 256
    %v248 = vld [vmem:[%s247] sm:$0xff]
    %v249 = vld [vmem:[%s247 + $0x8] sm:$0xff]
    %v250 = vld [vmem:[%s247 + $0x10] sm:$0xff]
    %v251 = vld [vmem:[%s247 + $0x18] sm:$0xff]
    %v252 = vld [vmem:[%s247 + $0x20] sm:$0xff]
    %v253 = vld [vmem:[%s247 + $0x28] sm:$0xff]
    %v254 = vld [vmem:[%s247 + $0x30] sm:$0xff]
    %v255 = vld [vmem:[%s247 + $0x38] sm:$0xff]
    %v256 = vld [vmem:[%s247 + $0x40] sm:$0xff]
    %v257 = vld [vmem:[%s247 + $0x48] sm:$0xff]
    %v258 = vld [vmem:[%s247 + $0x50] sm:$0xff]
    %v259 = vld [vmem:[%s247 + $0x58] sm:$0xff]
    %v260 = vld [vmem:[%s247 + $0x60] sm:$0xff]
    %v261 = vld [vmem:[%s247 + $0x68] sm:$0xff]
    %v262 = vld [vmem:[%s247 + $0x70] sm:$0xff]
    %v263 = vld [vmem:[%s247 + $0x78] sm:$0xff]
    %s264 = scalar_lea.vmem %s2, 2
    %v265 = vld [vmem:[%s264] sm:$0x1]
    %v267 = vlaneseq
    %v268 = vshrl.u32 %v267, 7
    %v269 = vsub.s32 0, %v268
    %v270 = vrot.slane %v265, %v269
    %272 = vmatprep.subr.mxu0 0.0
    %273 = vmatpush1.msra.mxu0 %v248
    %274 = vmatprep.subr.mxu0 0.0
    %275 = vmatpush1.msra.mxu0 %v249
    %276 = vmatprep.subr.mxu0 0.0
    %277 = vmatpush1.msra.mxu0 %v250
    %278 = vmatprep.subr.mxu0 0.0
    %279 = vmatpush1.msra.mxu0 %v251
    %280 = vmatprep.subr.mxu0 0.0
    %281 = vmatpush1.msra.mxu0 %v252
    %282 = vmatprep.subr.mxu0 0.0
    %283 = vmatpush1.msra.mxu0 %v253
    %284 = vmatprep.subr.mxu0 0.0
    %285 = vmatpush1.msra.mxu0 %v254
    %286 = vmatprep.subr.mxu0 0.0
    %287 = vmatpush1.msra.mxu0 %v255
    %288 = vmatprep.subr.mxu0 0.0
    %289 = vmatpush1.msra.mxu0 %v256
    %290 = vmatprep.subr.mxu0 0.0
    %291 = vmatpush1.msra.mxu0 %v257
    %292 = vmatprep.subr.mxu0 0.0
    %293 = vmatpush1.msra.mxu0 %v258
    %294 = vmatprep.subr.mxu0 0.0
    %295 = vmatpush1.msra.mxu0 %v259
    %296 = vmatprep.subr.mxu0 0.0
    %297 = vmatpush1.msra.mxu0 %v260
    %298 = vmatprep.subr.mxu0 0.0
    %299 = vmatpush1.msra.mxu0 %v261
    %300 = vmatprep.subr.mxu0 0.0
    %301 = vmatpush1.msra.mxu0 %v262
    %302 = vmatprep.subr.mxu0 0.0
    %303 = vmatpush1.msra.mxu0 %v263
    %304 = vmatprep.subr.mxu0 0.0
    %305 = vmatpush1.msra.mxu0 0.0
    %306 = vmatprep.subr.mxu0 0.0
    %307 = vmatpush1.msra.mxu0 0.0
    %308 = vmatprep.subr.mxu0 0.0
    %309 = vmatpush1.msra.mxu0 0.0
    %310 = vmatprep.subr.mxu0 0.0
    %311 = vmatpush1.msra.mxu0 0.0
    %312 = vmatprep.subr.mxu0 0.0
    %313 = vmatpush1.msra.mxu0 0.0
    %314 = vmatprep.subr.mxu0 0.0
    %315 = vmatpush1.msra.mxu0 0.0
    %316 = vmatprep.subr.mxu0 0.0
    %317 = vmatpush1.msra.mxu0 0.0
    %318 = vmatprep.subr.mxu0 0.0
    %319 = vmatpush1.msra.mxu0 0.0
    %320 = vmatprep.subr.mxu0 0.0
    %321 = vmatpush1.msra.mxu0 0.0
    %322 = vmatprep.subr.mxu0 0.0
    %323 = vmatpush1.msra.mxu0 0.0
    %324 = vmatprep.subr.mxu0 0.0
    %325 = vmatpush1.msra.mxu0 0.0
    %326 = vmatprep.subr.mxu0 0.0
    %327 = vmatpush1.msra.mxu0 0.0
    %328 = vmatprep.subr.mxu0 0.0
    %329 = vmatpush1.msra.mxu0 0.0
    %330 = vmatprep.subr.mxu0 0.0
    %331 = vmatpush1.msra.mxu0 0.0
    %332 = vmatprep.subr.mxu0 0.0
    %333 = vmatpush1.msra.mxu0 0.0
    %334 = vmatprep.subr.mxu0 0.0
    %335 = vmatpush1.msra.mxu0 0.0
    %336 = vmatprep.mubr.f32.mxu0 0.0
    %337 = vmatmul.mubr.f32.gmra.mrb[0].mxu0 %v245
    %v338 = vpop.f32.mrb[0].mxu0
    %v339 = vadd.f32 %v270, %v338
    %v340 = vpop.f32.mrb[0].mxu0
    %341 = vmatprep.mubr.f32.mxu0 0.0
    %342 = vmatmul.mubr.f32.gmra.mrb[0].mxu0 %v246
    %v343 = vpop.f32.mrb[0].mxu0
    %v344 = vadd.f32 %v270, %v343
    %v345 = vpop.f32.mrb[0].mxu0
    %346 = vdwg.mxu0
    %v347 = vmax.f32 %v339, 0.0
    %v348 = vmax.f32 %v344, 0.0
    %349 = vst [vmem:[#allocation7] sm:$0xff] %v347
    %350 = vst [vmem:[#allocation7 + $0x8] sm:$0xff] %v348
    // Predicated region
    $region22: #{tpu_custom_call.1} parent=1 // pred_check
      _
    $region23: #{tpu_custom_call.1} parent=1 // pred_check_branch
      %352 = sbr.rel (0) target = $region25
    $region24: #{tpu_custom_call.1} parent=1 // pred_region
      %s354 = ssub.s32 256, 256
      %355 = vsyncadd [#allocation4], %s354
      %s356 = sshll.u32 [#allocation7], 4
      %s357 = int_to_ptr.vmem [resolvable:$true] %s356
      %362 = dma.vmem_to_hbm [thread:$0]  %s357, 256, %s3, [#allocation4], 128, 128, 8
    $region25: #{tpu_custom_call.1} parent=1 // pred_fallthru
      _
    // Predicated region
    $region26: #{tpu_custom_call.1} parent=1 // pred_check
      _
    $region27: #{tpu_custom_call.1} parent=1 // pred_check_branch
      %364 = sbr.rel (0) target = $region29
    $region28: #{tpu_custom_call.1} parent=1 // pred_region
      %365 = dma.done [#allocation4], 256
    $region29: #{tpu_custom_call.1} parent=1 // pred_fallthru
      _
    %366 = vsyncpa [#allocation3], 1
    %367 = vsyncpa [#allocation6], 1
    %368 = vsyncpa [#allocation4], 1

</llo_original>
